<compile_context>
chip_gen: v6e
topology: v6e:2x2x1
jax: 0.10.0
libtpu: 0.0.40
codegen_flags: <defaults>
</compile_context>

<pallas_src>
import jax
import jax.numpy as jnp
from jax.experimental import pallas as pl
from jax.experimental.pallas import tpu as pltpu


_TRANS_THRESH = 0.02
_ANGLE_THRESH = 3.14 / 18.0          # matches the PyTorch literal (not math.pi)
_EPS = 1e-12                         # guards the zero-quaternion case (ref path)
_MAX_BLOCK_C = 2048                  # 2048*128 = 262144 rows / grid step
_SMALL_N = 512                       # below this, plain XLA beats kernel launch
_VMEM_LIMIT = 40 * 1024 * 1024       # fits v7x (64 MiB phys), raises v5e default


def _steploss_kernel(trans_ref, quat_ref, out_ref):
    """trans_ref: (3, BC, 128); quat_ref: (4, BC, 128); out_ref: (1, 8, 128)."""
    f32 = jnp.float32

    # ---- translation branch: relu(|t| - 0.02), per-lane dense --------------
    t0 = trans_ref[0].astype(f32)
    t1 = trans_ref[1].astype(f32)
    t2 = trans_ref[2].astype(f32)
    contrib = (jnp.maximum(jnp.abs(t0) - _TRANS_THRESH, 0.0)
               + jnp.maximum(jnp.abs(t1) - _TRANS_THRESH, 0.0)
               + jnp.maximum(jnp.abs(t2) - _TRANS_THRESH, 0.0))

    # ---- quaternion -> Euler (scale-invariant, division-free) --------------
    w = quat_ref[0].astype(f32)
    x = quat_ref[1].astype(f32)
    y = quat_ref[2].astype(f32)
    z = quat_ref[3].astype(f32)
    nrm = w * w + x * x + y * y + z * z

    roll = jnp.arctan2(2.0 * (w * x + y * z), nrm - 2.0 * (x * x + y * y))
    s = 2.0 * (w * y - z * x)
    # arcsin(s / nrm) == atan2(s, sqrt(nrm^2 - s^2)); no reciprocal, no clamp.
    # (nrm^2 can overflow f32 only for astronomically large unnormalized quats.)
    pitch = jnp.arctan2(s, jnp.sqrt(jnp.maximum(nrm * nrm - s * s, 0.0)))
    yaw = jnp.arctan2(2.0 * (w * z + x * y), nrm - 2.0 * (y * y + z * z))

    contrib = contrib + (jnp.maximum(jnp.abs(roll) - _ANGLE_THRESH, 0.0)
                         + jnp.maximum(jnp.abs(pitch) - _ANGLE_THRESH, 0.0)
                         + jnp.maximum(jnp.abs(yaw) - _ANGLE_THRESH, 0.0))

    # ---- per-block partial sum, VPU-only ------------------------------------
    # (BC,128) -> (BC//8,8,128) keeps the physical vreg layout (no-op view);
    # summing over axis 0 is plain elementwise vector adds, no XLU in the loop.
    bc = contrib.shape[0]
    partial = jnp.sum(contrib.reshape(bc // 8, 8, 128), axis=0)     # (8, 128)
    out_ref[...] = partial.reshape(1, 8, 128)


def _to_component_major(a, n_pad):
    """(N, K) -> (K, n_pad // 128, 128), zero padded, native dtype preserved."""
    n, k = a.shape
    a_t = jnp.transpose(a)                              # (K, N)
    a_t = jnp.pad(a_t, ((0, 0), (0, n_pad - n)))        # zero pad contributes 0
    return a_t.reshape(k, n_pad // 128, 128)


def _quat_to_angle_jax(quat):
    q = quat.astype(jnp.float32)
    w, x, y, z = q[:, 0], q[:, 1], q[:, 2], q[:, 3]
    nrm = w * w + x * x + y * y + z * z
    roll = jnp.arctan2(2.0 * (w * x + y * z), nrm - 2.0 * (x * x + y * y))
    sinp = jnp.clip(2.0 * (w * y - z * x) / (nrm + _EPS), -1.0, 1.0)
    pitch = jnp.arcsin(sinp)
    yaw = jnp.arctan2(2.0 * (w * z + x * y), nrm - 2.0 * (y * y + z * z))
    return jnp.stack([roll, pitch, yaw], axis=-1)


def _steploss_jax(trans_dlt, quat_dlt):
    """Pure-XLA fast path for tiny N (kernel launch overhead would dominate)."""
    angle = _quat_to_angle_jax(quat_dlt)
    t = trans_dlt.astype(jnp.float32)
    trans_mod = jax.nn.relu(jnp.abs(t) - _TRANS_THRESH)
    angle_mod = jax.nn.relu(jnp.abs(angle) - _ANGLE_THRESH)
    return jnp.mean(trans_mod) + jnp.mean(angle_mod)


@jax.jit
def step_loss(shape_dlt, trans_dlt, quat_dlt):
    # shape_dlt only serves as a broadcast source for scalar thresholds in the
    # PyTorch module -- its values never affect the loss, so it is never DMA'd.
    del shape_dlt

    n = trans_dlt.shape[0]
    if n < _SMALL_N:
        return _steploss_jax(trans_dlt, quat_dlt)

    # Lane-axis tiling: rows -> (C, 128); block BC chosen (8,128)-compatible.
    c = -(-n // 128)                               # ceil(n / 128)
    if c <= _MAX_BLOCK_C:
        bc = ((c + 15) // 16) * 16                 # one block, tile-aligned
        c_pad = bc
    else:
        bc = _MAX_BLOCK_C
        c_pad = ((c + bc - 1) // bc) * bc
    n_pad = c_pad * 128
    grid = c_pad // bc

    # Zero padding is exact: relu(|0| - 0.02) = 0, and an all-zero quaternion
    # maps (atan2(0,0) == 0) to zero angles -> relu(0 - thresh) = 0.
    trans_cm = _to_component_major(trans_dlt, n_pad)    # (3, c_pad, 128)
    quat_cm = _to_component_major(quat_dlt, n_pad)      # (4, c_pad, 128)

    partials = pl.pallas_call(
        _steploss_kernel,
        out_shape=jax.ShapeDtypeStruct((grid, 8, 128), jnp.float32),
        grid=(grid,),
        in_specs=[
            pl.BlockSpec((3, bc, 128), lambda i: (0, i, 0)),
            pl.BlockSpec((4, bc, 128), lambda i: (0, i, 0)),
        ],
        out_specs=pl.BlockSpec((1, 8, 128), lambda i: (i, 0, 0)),
        compiler_params=pltpu.CompilerParams(
            dimension_semantics=("parallel",),        # disjoint outputs -> megacore OK
            vmem_limit_bytes=_VMEM_LIMIT),
    )(trans_cm, quat_cm)

    # loss = mean(trans_mod) + mean(angle_mod); both means are over 3*N elems.
    inv_count = 1.0 / float(3 * n)
    return jnp.sum(partials) * inv_count


def step_loss_ref(shape_dlt, trans_dlt, quat_dlt):
    """Pure-JAX mirror of the PyTorch forward (same assumed quatToAngle)."""
    angle_dlt = _quat_to_angle_jax(quat_dlt)
    trans_thresh = jnp.ones_like(shape_dlt) * _TRANS_THRESH
    angle_thresh = jnp.ones_like(shape_dlt) * _ANGLE_THRESH
    trans_mod = jax.nn.relu(jnp.abs(trans_dlt) - trans_thresh)
    angle_mod = jax.nn.relu(jnp.abs(angle_dlt) - angle_thresh)
    return jnp.mean(trans_mod) + jnp.mean(angle_mod)


if __name__ == "__main__":
    key = jax.random.PRNGKey(0)
    k1, k2, k3 = jax.random.split(key, 3)

    # Small but above the tiny-N bypass so the Pallas path (incl. the ragged,
    # zero-padded tail) is exercised.
    N = 4173
    shape_dlt = jax.random.normal(k1, (N, 3), dtype=jnp.float32) * 0.1
    trans_dlt = jax.random.normal(k2, (N, 3), dtype=jnp.float32) * 0.05
    quat_dlt = jax.random.normal(k3, (N, 4), dtype=jnp.float32)
    # bias toward identity-ish quaternion (small rotation deltas), unnormalized
    quat_dlt = quat_dlt.at[:, 0].add(4.0)

    loss = step_loss(shape_dlt, trans_dlt, quat_dlt)
    jax.block_until_ready(loss)

    ref = step_loss_ref(shape_dlt, trans_dlt, quat_dlt)
    assert jnp.allclose(loss, ref, atol=1e-5, rtol=1e-5), (loss, ref)

    print("KERNEL_OK")
</pallas_src>

<mosaic_0001>
module attributes {stable_mosaic.version = 11 : i64} {
  func.func @_steploss_kernel(%arg0: i32, %arg1: memref<3x48x128xf32, #tpu.memory_space<vmem>>, %arg2: memref<4x48x128xf32, #tpu.memory_space<vmem>>, %arg3: memref<1x8x128xf32, #tpu.memory_space<vmem>>) attributes {dimension_semantics = [#tpu.dimension_semantics<parallel>], iteration_bounds = array<i64: 1>, scalar_prefetch = 0 : i64, scratch_operands = 0 : i64, tpu.core_type = #tpu.core_type<tc>, window_params = [{transform_indices = @transform_0, window_bounds = array<i64: 3, 48, 128>}, {transform_indices = @transform_1, window_bounds = array<i64: 4, 48, 128>}, {transform_indices = @transform_2, window_bounds = array<i64: 1, 8, 128>}]} {
    %c0 = arith.constant 0 : index
    %c0_0 = arith.constant 0 : index
    %c0_1 = arith.constant 0 : index
    %0 = vector.load %arg1[%c0, %c0_0, %c0_1] : memref<3x48x128xf32, #tpu.memory_space<vmem>>, vector<1x48x128xf32>
    %1 = vector.shape_cast %0 : vector<1x48x128xf32> to vector<48x128xf32>
    %c1 = arith.constant 1 : index
    %c0_2 = arith.constant 0 : index
    %c0_3 = arith.constant 0 : index
    %2 = vector.load %arg1[%c1, %c0_2, %c0_3] : memref<3x48x128xf32, #tpu.memory_space<vmem>>, vector<1x48x128xf32>
    %3 = vector.shape_cast %2 : vector<1x48x128xf32> to vector<48x128xf32>
    %c2 = arith.constant 2 : index
    %c0_4 = arith.constant 0 : index
    %c0_5 = arith.constant 0 : index
    %4 = vector.load %arg1[%c2, %c0_4, %c0_5] : memref<3x48x128xf32, #tpu.memory_space<vmem>>, vector<1x48x128xf32>
    %5 = vector.shape_cast %4 : vector<1x48x128xf32> to vector<48x128xf32>
    %6 = math.absf %1 : vector<48x128xf32>
    %cst = arith.constant 2.000000e-02 : f32
    %7 = vector.broadcast %cst : f32 to vector<48x128xf32>
    %8 = arith.subf %6, %7 : vector<48x128xf32>
    %cst_6 = arith.constant 0.000000e+00 : f32
    %9 = vector.broadcast %cst_6 : f32 to vector<48x128xf32>
    %10 = arith.maximumf %8, %9 : vector<48x128xf32>
    %11 = math.absf %3 : vector<48x128xf32>
    %cst_7 = arith.constant 2.000000e-02 : f32
    %12 = vector.broadcast %cst_7 : f32 to vector<48x128xf32>
    %13 = arith.subf %11, %12 : vector<48x128xf32>
    %cst_8 = arith.constant 0.000000e+00 : f32
    %14 = vector.broadcast %cst_8 : f32 to vector<48x128xf32>
    %15 = arith.maximumf %13, %14 : vector<48x128xf32>
    %16 = arith.addf %10, %15 : vector<48x128xf32>
    %17 = math.absf %5 : vector<48x128xf32>
    %cst_9 = arith.constant 2.000000e-02 : f32
    %18 = vector.broadcast %cst_9 : f32 to vector<48x128xf32>
    %19 = arith.subf %17, %18 : vector<48x128xf32>
    %cst_10 = arith.constant 0.000000e+00 : f32
    %20 = vector.broadcast %cst_10 : f32 to vector<48x128xf32>
    %21 = arith.maximumf %19, %20 : vector<48x128xf32>
    %22 = arith.addf %16, %21 : vector<48x128xf32>
    %c0_11 = arith.constant 0 : index
    %c0_12 = arith.constant 0 : index
    %c0_13 = arith.constant 0 : index
    %23 = vector.load %arg2[%c0_11, %c0_12, %c0_13] : memref<4x48x128xf32, #tpu.memory_space<vmem>>, vector<1x48x128xf32>
    %24 = vector.shape_cast %23 : vector<1x48x128xf32> to vector<48x128xf32>
    %c1_14 = arith.constant 1 : index
    %c0_15 = arith.constant 0 : index
    %c0_16 = arith.constant 0 : index
    %25 = vector.load %arg2[%c1_14, %c0_15, %c0_16] : memref<4x48x128xf32, #tpu.memory_space<vmem>>, vector<1x48x128xf32>
    %26 = vector.shape_cast %25 : vector<1x48x128xf32> to vector<48x128xf32>
    %c2_17 = arith.constant 2 : index
    %c0_18 = arith.constant 0 : index
    %c0_19 = arith.constant 0 : index
    %27 = vector.load %arg2[%c2_17, %c0_18, %c0_19] : memref<4x48x128xf32, #tpu.memory_space<vmem>>, vector<1x48x128xf32>
    %28 = vector.shape_cast %27 : vector<1x48x128xf32> to vector<48x128xf32>
    %c3 = arith.constant 3 : index
    %c0_20 = arith.constant 0 : index
    %c0_21 = arith.constant 0 : index
    %29 = vector.load %arg2[%c3, %c0_20, %c0_21] : memref<4x48x128xf32, #tpu.memory_space<vmem>>, vector<1x48x128xf32>
    %30 = vector.shape_cast %29 : vector<1x48x128xf32> to vector<48x128xf32>
    %31 = arith.mulf %24, %24 : vector<48x128xf32>
    %32 = arith.mulf %26, %26 : vector<48x128xf32>
    %33 = arith.addf %31, %32 : vector<48x128xf32>
    %34 = arith.mulf %28, %28 : vector<48x128xf32>
    %35 = arith.addf %33, %34 : vector<48x128xf32>
    %36 = arith.mulf %30, %30 : vector<48x128xf32>
    %37 = arith.addf %35, %36 : vector<48x128xf32>
    %38 = arith.mulf %24, %26 : vector<48x128xf32>
    %39 = arith.mulf %28, %30 : vector<48x128xf32>
    %40 = arith.addf %38, %39 : vector<48x128xf32>
    %cst_22 = arith.constant 2.000000e+00 : f32
    %41 = vector.broadcast %cst_22 : f32 to vector<48x128xf32>
    %42 = arith.mulf %41, %40 : vector<48x128xf32>
    %43 = arith.mulf %26, %26 : vector<48x128xf32>
    %44 = arith.mulf %28, %28 : vector<48x128xf32>
    %45 = arith.addf %43, %44 : vector<48x128xf32>
    %cst_23 = arith.constant 2.000000e+00 : f32
    %46 = vector.broadcast %cst_23 : f32 to vector<48x128xf32>
    %47 = arith.mulf %46, %45 : vector<48x128xf32>
    %48 = arith.subf %37, %47 : vector<48x128xf32>
    %49 = math.atan2 %42, %48 : vector<48x128xf32>
    %50 = arith.mulf %24, %28 : vector<48x128xf32>
    %51 = arith.mulf %30, %26 : vector<48x128xf32>
    %52 = arith.subf %50, %51 : vector<48x128xf32>
    %cst_24 = arith.constant 2.000000e+00 : f32
    %53 = vector.broadcast %cst_24 : f32 to vector<48x128xf32>
    %54 = arith.mulf %53, %52 : vector<48x128xf32>
    %55 = arith.mulf %37, %37 : vector<48x128xf32>
    %56 = arith.mulf %54, %54 : vector<48x128xf32>
    %57 = arith.subf %55, %56 : vector<48x128xf32>
    %cst_25 = arith.constant 0.000000e+00 : f32
    %58 = vector.broadcast %cst_25 : f32 to vector<48x128xf32>
    %59 = arith.maximumf %57, %58 : vector<48x128xf32>
    %60 = math.sqrt %59 : vector<48x128xf32>
    %61 = math.atan2 %54, %60 : vector<48x128xf32>
    %62 = arith.mulf %24, %30 : vector<48x128xf32>
    %63 = arith.mulf %26, %28 : vector<48x128xf32>
    %64 = arith.addf %62, %63 : vector<48x128xf32>
    %cst_26 = arith.constant 2.000000e+00 : f32
    %65 = vector.broadcast %cst_26 : f32 to vector<48x128xf32>
    %66 = arith.mulf %65, %64 : vector<48x128xf32>
    %67 = arith.mulf %28, %28 : vector<48x128xf32>
    %68 = arith.mulf %30, %30 : vector<48x128xf32>
    %69 = arith.addf %67, %68 : vector<48x128xf32>
    %cst_27 = arith.constant 2.000000e+00 : f32
    %70 = vector.broadcast %cst_27 : f32 to vector<48x128xf32>
    %71 = arith.mulf %70, %69 : vector<48x128xf32>
    %72 = arith.subf %37, %71 : vector<48x128xf32>
    %73 = math.atan2 %66, %72 : vector<48x128xf32>
    %74 = math.absf %49 : vector<48x128xf32>
    %cst_28 = arith.constant 0.174444437 : f32
    %75 = vector.broadcast %cst_28 : f32 to vector<48x128xf32>
    %76 = arith.subf %74, %75 : vector<48x128xf32>
    %cst_29 = arith.constant 0.000000e+00 : f32
    %77 = vector.broadcast %cst_29 : f32 to vector<48x128xf32>
    %78 = arith.maximumf %76, %77 : vector<48x128xf32>
    %79 = math.absf %61 : vector<48x128xf32>
    %cst_30 = arith.constant 0.174444437 : f32
    %80 = vector.broadcast %cst_30 : f32 to vector<48x128xf32>
    %81 = arith.subf %79, %80 : vector<48x128xf32>
    %cst_31 = arith.constant 0.000000e+00 : f32
    %82 = vector.broadcast %cst_31 : f32 to vector<48x128xf32>
    %83 = arith.maximumf %81, %82 : vector<48x128xf32>
    %84 = arith.addf %78, %83 : vector<48x128xf32>
    %85 = math.absf %73 : vector<48x128xf32>
    %cst_32 = arith.constant 0.174444437 : f32
    %86 = vector.broadcast %cst_32 : f32 to vector<48x128xf32>
    %87 = arith.subf %85, %86 : vector<48x128xf32>
    %cst_33 = arith.constant 0.000000e+00 : f32
    %88 = vector.broadcast %cst_33 : f32 to vector<48x128xf32>
    %89 = arith.maximumf %87, %88 : vector<48x128xf32>
    %90 = arith.addf %84, %89 : vector<48x128xf32>
    %91 = arith.addf %22, %90 : vector<48x128xf32>
    %92 = vector.shape_cast %91 : vector<48x128xf32> to vector<6x8x128xf32>
    %cst_34 = arith.constant dense<0.000000e+00> : vector<8x128xf32>
    %93 = vector.multi_reduction <add>, %92, %cst_34 [0] : vector<6x8x128xf32> to vector<8x128xf32>
    %94 = vector.shape_cast %93 : vector<8x128xf32> to vector<1x8x128xf32>
    %c0_35 = arith.constant 0 : index
    %c0_36 = arith.constant 0 : index
    %c0_37 = arith.constant 0 : index
    %95 = vector.load %arg3[%c0_35, %c0_36, %c0_37] : memref<1x8x128xf32, #tpu.memory_space<vmem>>, vector<1x8x128xf32>
    tpu.vector_store %arg3[%c0_35, %c0_36, %c0_37], %94 {strides = array<i32>} : memref<1x8x128xf32, #tpu.memory_space<vmem>>, vector<1x8x128xf32>,
    return
  }
  func.func @transform_0(%arg0: i32) -> (i32, i32, i32) {
    %c0_i32 = arith.constant 0 : i32
    %c0_i32_0 = arith.constant 0 : i32
    %c0_i32_1 = arith.constant 0 : i32
    return %c0_i32, %arg0, %c0_i32_0 : i32, i32, i32
  }
  func.func @transform_1(%arg0: i32) -> (i32, i32, i32) {
    %c0_i32 = arith.constant 0 : i32
    %c0_i32_0 = arith.constant 0 : i32
    %c0_i32_1 = arith.constant 0 : i32
    return %c0_i32, %arg0, %c0_i32_0 : i32, i32, i32
  }
  func.func @transform_2(%arg0: i32) -> (i32, i32, i32) {
    %c0_i32 = arith.constant 0 : i32
    %c0_i32_0 = arith.constant 0 : i32
    %c0_i32_1 = arith.constant 0 : i32
    return %arg0, %c0_i32, %c0_i32_0 : i32, i32, i32
  }
}

</mosaic_0001>

<llo_original>
// kernel: step_loss.1
$region0: #{step_loss.1}
  #allocation0 [shape = 'u32[]', space=smem, size = 0x4, offset = 0x4, fixed_abs, tag = 'smem constant byte address 0x4 - core index']
  #allocation1 [shape = 'u32[144,128]{1,0:T(1,128)}', space=vmem, size = 0x12000, scoped, tag = 'internal scratch']
  %s0 = inlined_call_operand.vmem [shape: f32[3,48,128], index: 0, kind: input, shape index: {}]
  %s1 = inlined_call_operand.vmem [shape: f32[4,48,128], index: 1, kind: input, shape index: {}]
  %s2 = inlined_call_operand.vmem [shape: f32[1,8,128], index: 2, kind: output, shape index: {}]
  %s3 = sld [smem:[#allocation0]]
  $region18: #{step_loss.1} parent=0
    _
  %s5 = ssub.s32 1, %s3
  %s6 = scalar_select 0, %s5, %s3
  // Predicated region
  $region2: #{step_loss.1} parent=0 // pred_check
    _
  $region3: #{step_loss.1} parent=0 // pred_check_branch
    %8 = sbr.rel (0) target = $region5
  $region4: #{step_loss.1} parent=0 // pred_region
    _
  $region5: #{step_loss.1} parent=0 // pred_fallthru
    _
  // Predicated region
  $region6: #{step_loss.1} parent=0 // pred_check
    _
  $region7: #{step_loss.1} parent=0 // pred_check_branch
    %10 = sbr.rel (0) target = $region9
  $region8: #{step_loss.1} parent=0 // pred_region
    _
  $region9: #{step_loss.1} parent=0 // pred_fallthru
    _
  %v11 = vld [vmem:[%s0] sm:$0xff]
  %v12 = vld [vmem:[%s0 + $0x8] sm:$0xff]
  %v13 = vld [vmem:[%s0 + $0x10] sm:$0xff]
  %v14 = vld [vmem:[%s0 + $0x18] sm:$0xff]
  %v15 = vld [vmem:[%s0 + $0x20] sm:$0xff]
  %v16 = vld [vmem:[%s0 + $0x28] sm:$0xff]
  %s17 = scalar_lea.vmem %s0, 48
  %v18 = vld [vmem:[%s17] sm:$0xff]
  %v19 = vld [vmem:[%s17 + $0x8] sm:$0xff]
  %v20 = vld [vmem:[%s17 + $0x10] sm:$0xff]
  %v21 = vld [vmem:[%s17 + $0x18] sm:$0xff]
  %v22 = vld [vmem:[%s17 + $0x20] sm:$0xff]
  %v23 = vld [vmem:[%s17 + $0x28] sm:$0xff]
  %s24 = scalar_lea.vmem %s0, 96
  %v25 = vld [vmem:[%s24] sm:$0xff]
  %v26 = vld [vmem:[%s24 + $0x8] sm:$0xff]
  %v27 = vld [vmem:[%s24 + $0x10] sm:$0xff]
  %v28 = vld [vmem:[%s24 + $0x18] sm:$0xff]
  %v29 = vld [vmem:[%s24 + $0x20] sm:$0xff]
  %v30 = vld [vmem:[%s24 + $0x28] sm:$0xff]
  %v31 = vand.u32 2147483647, %v11
  %v32 = vand.u32 2147483647, %v12
  %v33 = vand.u32 2147483647, %v13
  %v34 = vand.u32 2147483647, %v14
  %v35 = vand.u32 2147483647, %v15
  %v36 = vand.u32 2147483647, %v16
  %v37 = vsub.f32 %v31, 0.02
  %v38 = vsub.f32 %v32, 0.02
  %v39 = vsub.f32 %v33, 0.02
  %v40 = vsub.f32 %v34, 0.02
  %v41 = vsub.f32 %v35, 0.02
  %v42 = vsub.f32 %v36, 0.02
  %v43 = vmax.f32 %v37, 0.0
  %v44 = vmax.f32 %v38, 0.0
  %v45 = vmax.f32 %v39, 0.0
  %v46 = vmax.f32 %v40, 0.0
  %v47 = vmax.f32 %v41, 0.0
  %v48 = vmax.f32 %v42, 0.0
  %v49 = vand.u32 2147483647, %v18
  %v50 = vand.u32 2147483647, %v19
  %v51 = vand.u32 2147483647, %v20
  %v52 = vand.u32 2147483647, %v21
  %v53 = vand.u32 2147483647, %v22
  %v54 = vand.u32 2147483647, %v23
  %v55 = vsub.f32 %v49, 0.02
  %v56 = vsub.f32 %v50, 0.02
  %v57 = vsub.f32 %v51, 0.02
  %v58 = vsub.f32 %v52, 0.02
  %v59 = vsub.f32 %v53, 0.02
  %v60 = vsub.f32 %v54, 0.02
  %v61 = vmax.f32 %v55, 0.0
  %v62 = vmax.f32 %v56, 0.0
  %v63 = vmax.f32 %v57, 0.0
  %v64 = vmax.f32 %v58, 0.0
  %v65 = vmax.f32 %v59, 0.0
  %v66 = vmax.f32 %v60, 0.0
  %v67 = vadd.f32 %v43, %v61
  %v68 = vadd.f32 %v44, %v62
  %v69 = vadd.f32 %v45, %v63
  %v70 = vadd.f32 %v46, %v64
  %v71 = vadd.f32 %v47, %v65
  %v72 = vadd.f32 %v48, %v66
  %v73 = vand.u32 2147483647, %v25
  %v74 = vand.u32 2147483647, %v26
  %v75 = vand.u32 2147483647, %v27
  %v76 = vand.u32 2147483647, %v28
  %v77 = vand.u32 2147483647, %v29
  %v78 = vand.u32 2147483647, %v30
  %v79 = vsub.f32 %v73, 0.02
  %v80 = vsub.f32 %v74, 0.02
  %v81 = vsub.f32 %v75, 0.02
  %v82 = vsub.f32 %v76, 0.02
  %v83 = vsub.f32 %v77, 0.02
  %v84 = vsub.f32 %v78, 0.02
  %v85 = vmax.f32 %v79, 0.0
  %v86 = vmax.f32 %v80, 0.0
  %v87 = vmax.f32 %v81, 0.0
  %v88 = vmax.f32 %v82, 0.0
  %v89 = vmax.f32 %v83, 0.0
  %v90 = vmax.f32 %v84, 0.0
  %v91 = vadd.f32 %v67, %v85
  %v92 = vadd.f32 %v68, %v86
  %v93 = vadd.f32 %v69, %v87
  %v94 = vadd.f32 %v70, %v88
  %v95 = vadd.f32 %v71, %v89
  %v96 = vadd.f32 %v72, %v90
  %v97 = vld [vmem:[%s1] sm:$0xff]
  %v98 = vld [vmem:[%s1 + $0x8] sm:$0xff]
  %v99 = vld [vmem:[%s1 + $0x10] sm:$0xff]
  %v100 = vld [vmem:[%s1 + $0x18] sm:$0xff]
  %v101 = vld [vmem:[%s1 + $0x20] sm:$0xff]
  %v102 = vld [vmem:[%s1 + $0x28] sm:$0xff]
  %s103 = scalar_lea.vmem %s1, 48
  %v104 = vld [vmem:[%s103] sm:$0xff]
  %v105 = vld [vmem:[%s103 + $0x8] sm:$0xff]
  %v106 = vld [vmem:[%s103 + $0x10] sm:$0xff]
  %v107 = vld [vmem:[%s103 + $0x18] sm:$0xff]
  %v108 = vld [vmem:[%s103 + $0x20] sm:$0xff]
  %v109 = vld [vmem:[%s103 + $0x28] sm:$0xff]
  %s110 = scalar_lea.vmem %s1, 96
  %v111 = vld [vmem:[%s110] sm:$0xff]
  %v112 = vld [vmem:[%s110 + $0x8] sm:$0xff]
  %v113 = vld [vmem:[%s110 + $0x10] sm:$0xff]
  %v114 = vld [vmem:[%s110 + $0x18] sm:$0xff]
  %v115 = vld [vmem:[%s110 + $0x20] sm:$0xff]
  %v116 = vld [vmem:[%s110 + $0x28] sm:$0xff]
  %s117 = scalar_lea.vmem %s1, 144
  %v118 = vld [vmem:[%s117] sm:$0xff]
  %v119 = vld [vmem:[%s117 + $0x8] sm:$0xff]
  %v120 = vld [vmem:[%s117 + $0x10] sm:$0xff]
  %v121 = vld [vmem:[%s117 + $0x18] sm:$0xff]
  %v122 = vld [vmem:[%s117 + $0x20] sm:$0xff]
  %v123 = vld [vmem:[%s117 + $0x28] sm:$0xff]
  %v124 = vmul.f32 %v97, %v97
  %v125 = vmul.f32 %v98, %v98
  %v126 = vmul.f32 %v99, %v99
  %v127 = vmul.f32 %v100, %v100
  %v128 = vmul.f32 %v101, %v101
  %v129 = vmul.f32 %v102, %v102
  %v130 = vmul.f32 %v104, %v104
  %v131 = vmul.f32 %v105, %v105
  %v132 = vmul.f32 %v106, %v106
  %v133 = vmul.f32 %v107, %v107
  %v134 = vmul.f32 %v108, %v108
  %v135 = vmul.f32 %v109, %v109
  %v136 = vadd.f32 %v124, %v130
  %v137 = vadd.f32 %v125, %v131
  %v138 = vadd.f32 %v126, %v132
  %v139 = vadd.f32 %v127, %v133
  %v140 = vadd.f32 %v128, %v134
  %v141 = vadd.f32 %v129, %v135
  %v142 = vmul.f32 %v111, %v111
  %v143 = vmul.f32 %v112, %v112
  %v144 = vmul.f32 %v113, %v113
  %v145 = vmul.f32 %v114, %v114
  %v146 = vmul.f32 %v115, %v115
  %v147 = vmul.f32 %v116, %v116
  %v148 = vadd.f32 %v136, %v142
  %v149 = vadd.f32 %v137, %v143
  %v150 = vadd.f32 %v138, %v144
  %v151 = vadd.f32 %v139, %v145
  %v152 = vadd.f32 %v140, %v146
  %v153 = vadd.f32 %v141, %v147
  %v154 = vmul.f32 %v118, %v118
  %v155 = vmul.f32 %v119, %v119
  %v156 = vmul.f32 %v120, %v120
  %v157 = vmul.f32 %v121, %v121
  %v158 = vmul.f32 %v122, %v122
  %v159 = vmul.f32 %v123, %v123
  %v160 = vadd.f32 %v148, %v154
  %v161 = vadd.f32 %v149, %v155
  %v162 = vadd.f32 %v150, %v156
  %v163 = vadd.f32 %v151, %v157
  %v164 = vadd.f32 %v152, %v158
  %v165 = vadd.f32 %v153, %v159
  %v166 = vmul.f32 %v97, %v104
  %v167 = vmul.f32 %v98, %v105
  %v168 = vmul.f32 %v99, %v106
  %v169 = vmul.f32 %v100, %v107
  %v170 = vmul.f32 %v101, %v108
  %v171 = vmul.f32 %v102, %v109
  %v172 = vmul.f32 %v111, %v118
  %v173 = vmul.f32 %v112, %v119
  %v174 = vmul.f32 %v113, %v120
  %v175 = vmul.f32 %v114, %v121
  %v176 = vmul.f32 %v115, %v122
  %v177 = vmul.f32 %v116, %v123
  %v178 = vadd.f32 %v166, %v172
  %v179 = vadd.f32 %v167, %v173
  %v180 = vadd.f32 %v168, %v174
  %v181 = vadd.f32 %v169, %v175
  %v182 = vadd.f32 %v170, %v176
  %v183 = vadd.f32 %v171, %v177
  %v184 = vmul.f32 %v178, 2.0
  %v185 = vmul.f32 %v179, 2.0
  %v186 = vmul.f32 %v180, 2.0
  %v187 = vmul.f32 %v181, 2.0
  %v188 = vmul.f32 %v182, 2.0
  %v189 = vmul.f32 %v183, 2.0
  %v190 = vadd.f32 %v130, %v142
  %v191 = vadd.f32 %v131, %v143
  %v192 = vadd.f32 %v132, %v144
  %v193 = vadd.f32 %v133, %v145
  %v194 = vadd.f32 %v134, %v146
  %v195 = vadd.f32 %v135, %v147
  %v196 = vmul.f32 %v190, 2.0
  %v197 = vmul.f32 %v191, 2.0
  %v198 = vmul.f32 %v192, 2.0
  %v199 = vmul.f32 %v193, 2.0
  %v200 = vmul.f32 %v194, 2.0
  %v201 = vmul.f32 %v195, 2.0
  %v202 = vsub.f32 %v160, %v196
  %v203 = vsub.f32 %v161, %v197
  %v204 = vsub.f32 %v162, %v198
  %v205 = vsub.f32 %v163, %v199
  %v206 = vsub.f32 %v164, %v200
  %v207 = vsub.f32 %v165, %v201
  %v208 = vand.u32 2147483647, %v202
  %v209 = vand.u32 2147483647, %v184
  %v210 = vmin.f32 %v208, %v209
  %v211 = vmax.f32 %v208, %v209
  %v212 = vrcp.pop %v211
  %v213 = vmul.f32 %v210, %v212
  %v214 = vmul.f32 %v213, %v213
  %v215 = vmul.f32 0.002785687, %v214
  %v216 = vadd.f32 %v215, -0.015866
  %v217 = vmul.f32 %v216, %v214
  %v218 = vadd.f32 %v217, 0.04247222
  %v219 = vmul.f32 %v218, %v214
  %v220 = vadd.f32 %v219, -0.074975304
  %v221 = vmul.f32 %v220, %v214
  %v222 = vadd.f32 %v221, 0.1064488
  %v223 = vmul.f32 %v222, %v214
  %v224 = vadd.f32 %v223, -0.14207031
  %v225 = vmul.f32 %v224, %v214
  %v226 = vadd.f32 %v225, 0.19993454
  %v227 = vmul.f32 %v226, %v214
  %v228 = vadd.f32 %v227, -0.33333147
  %v229 = vmul.f32 %v228, %v214
  %v230 = vmul.f32 %v229, %v213
  %v231 = vadd.f32 %v230, %v213
  %vm232 = vcmp.gt.f32.partialorder %v209, %v208
  %v233 = vsub.f32 1.5707964, %v231
  %v234 = vsel %vm232, %v233, %v231
  %vm235 = vcmp.lt.f32.partialorder %v202, 0.0
  %v236 = vsub.f32 3.1415927, %v234
  %v237 = vsel %vm235, %v236, %v234
  %vm238 = vcmp.lt.s32.totalorder %v202, 0
  %v239 = vsel %vm238, 3.1415927, 0.0
  %vm240 = vcmp.eq.f32.partialorder %v184, 0.0
  %v241 = vsel %vm240, %v239, %v237
  %vm242 = vcmp.ne.f32.partialorder %v202, %v202
  %vm243 = vcmp.ne.f32.partialorder %v184, %v184
  %vm244 = vmor %vm242, %vm243
  %v245 = vsel %vm244, nan, %v241
  %vm246 = vcmp.lt.f32.partialorder %v202, 0.0
  %v247 = vsel %vm246, 2.3561945, 0.7853982
  %vm248 = vcmp.eq.s32.totalorder %v208, inf
  %vm249 = vcmp.eq.s32.totalorder %v209, inf
  %vm250 = vmand %vm248, %vm249
  %v251 = vsel %vm250, %v247, %v245
  %v252 = vand.u32 2147483647, %v251
  %v253 = vand.u32 %v184, 2147483648
  %v254 = vor.u32 %v252, %v253
  %v255 = vand.u32 2147483647, %v203
  %v256 = vand.u32 2147483647, %v185
  %v257 = vmin.f32 %v255, %v256
  %v258 = vmax.f32 %v255, %v256
  %v259 = vrcp.pop %v258
  %v260 = vmul.f32 %v257, %v259
  %v261 = vmul.f32 %v260, %v260
  %v262 = vmul.f32 0.002785687, %v261
  %v263 = vadd.f32 %v262, -0.015866
  %v264 = vmul.f32 %v263, %v261
  %v265 = vadd.f32 %v264, 0.04247222
  %v266 = vmul.f32 %v265, %v261
  %v267 = vadd.f32 %v266, -0.074975304
  %v268 = vmul.f32 %v267, %v261
  %v269 = vadd.f32 %v268, 0.1064488
  %v270 = vmul.f32 %v269, %v261
  %v271 = vadd.f32 %v270, -0.14207031
  %v272 = vmul.f32 %v271, %v261
  %v273 = vadd.f32 %v272, 0.19993454
  %v274 = vmul.f32 %v273, %v261
  %v275 = vadd.f32 %v274, -0.33333147
  %v276 = vmul.f32 %v275, %v261
  %v277 = vmul.f32 %v276, %v260
  %v278 = vadd.f32 %v277, %v260
  %vm279 = vcmp.gt.f32.partialorder %v256, %v255
  %v280 = vsub.f32 1.5707964, %v278
  %v281 = vsel %vm279, %v280, %v278
  %vm282 = vcmp.lt.f32.partialorder %v203, 0.0
  %v283 = vsub.f32 3.1415927, %v281
  %v284 = vsel %vm282, %v283, %v281
  %vm285 = vcmp.lt.s32.totalorder %v203, 0
  %v286 = vsel %vm285, 3.1415927, 0.0
  %vm287 = vcmp.eq.f32.partialorder %v185, 0.0
  %v288 = vsel %vm287, %v286, %v284
  %vm289 = vcmp.ne.f32.partialorder %v203, %v203
  %vm290 = vcmp.ne.f32.partialorder %v185, %v185
  %vm291 = vmor %vm289, %vm290
  %v292 = vsel %vm291, nan, %v288
  %vm293 = vcmp.lt.f32.partialorder %v203, 0.0
  %v294 = vsel %vm293, 2.3561945, 0.7853982
  %vm295 = vcmp.eq.s32.totalorder %v255, inf
  %vm296 = vcmp.eq.s32.totalorder %v256, inf
  %vm297 = vmand %vm295, %vm296
  %v298 = vsel %vm297, %v294, %v292
  %v299 = vand.u32 2147483647, %v298
  %v300 = vand.u32 %v185, 2147483648
  %v301 = vor.u32 %v299, %v300
  %v302 = vand.u32 2147483647, %v204
  %v303 = vand.u32 2147483647, %v186
  %v304 = vmin.f32 %v302, %v303
  %v305 = vmax.f32 %v302, %v303
  %v306 = vrcp.pop %v305
  %v307 = vmul.f32 %v304, %v306
  %v308 = vmul.f32 %v307, %v307
  %v309 = vmul.f32 0.002785687, %v308
  %v310 = vadd.f32 %v309, -0.015866
  %v311 = vmul.f32 %v310, %v308
  %v312 = vadd.f32 %v311, 0.04247222
  %v313 = vmul.f32 %v312, %v308
  %v314 = vadd.f32 %v313, -0.074975304
  %v315 = vmul.f32 %v314, %v308
  %v316 = vadd.f32 %v315, 0.1064488
  %v317 = vmul.f32 %v316, %v308
  %v318 = vadd.f32 %v317, -0.14207031
  %v319 = vmul.f32 %v318, %v308
  %v320 = vadd.f32 %v319, 0.19993454
  %v321 = vmul.f32 %v320, %v308
  %v322 = vadd.f32 %v321, -0.33333147
  %v323 = vmul.f32 %v322, %v308
  %v324 = vmul.f32 %v323, %v307
  %v325 = vadd.f32 %v324, %v307
  %vm326 = vcmp.gt.f32.partialorder %v303, %v302
  %v327 = vsub.f32 1.5707964, %v325
  %v328 = vsel %vm326, %v327, %v325
  %vm329 = vcmp.lt.f32.partialorder %v204, 0.0
  %v330 = vsub.f32 3.1415927, %v328
  %v331 = vsel %vm329, %v330, %v328
  %vm332 = vcmp.lt.s32.totalorder %v204, 0
  %v333 = vsel %vm332, 3.1415927, 0.0
  %vm334 = vcmp.eq.f32.partialorder %v186, 0.0
  %v335 = vsel %vm334, %v333, %v331
  %vm336 = vcmp.ne.f32.partialorder %v204, %v204
  %vm337 = vcmp.ne.f32.partialorder %v186, %v186
  %vm338 = vmor %vm336, %vm337
  %v339 = vsel %vm338, nan, %v335
  %vm340 = vcmp.lt.f32.partialorder %v204, 0.0
  %v341 = vsel %vm340, 2.3561945, 0.7853982
  %vm342 = vcmp.eq.s32.totalorder %v302, inf
  %vm343 = vcmp.eq.s32.totalorder %v303, inf
  %vm344 = vmand %vm342, %vm343
  %v345 = vsel %vm344, %v341, %v339
  %v346 = vand.u32 2147483647, %v345
  %v347 = vand.u32 %v186, 2147483648
  %v348 = vor.u32 %v346, %v347
  %v349 = vand.u32 2147483647, %v205
  %v350 = vand.u32 2147483647, %v187
  %v351 = vmin.f32 %v349, %v350
  %v352 = vmax.f32 %v349, %v350
  %v353 = vrcp.pop %v352
  %v354 = vmul.f32 %v351, %v353
  %v355 = vmul.f32 %v354, %v354
  %v356 = vmul.f32 0.002785687, %v355
  %v357 = vadd.f32 %v356, -0.015866
  %v358 = vmul.f32 %v357, %v355
  %v359 = vadd.f32 %v358, 0.04247222
  %v360 = vmul.f32 %v359, %v355
  %v361 = vadd.f32 %v360, -0.074975304
  %v362 = vmul.f32 %v361, %v355
  %v363 = vadd.f32 %v362, 0.1064488
  %v364 = vmul.f32 %v363, %v355
  %v365 = vadd.f32 %v364, -0.14207031
  %v366 = vmul.f32 %v365, %v355
  %v367 = vadd.f32 %v366, 0.19993454
  %v368 = vmul.f32 %v367, %v355
  %v369 = vadd.f32 %v368, -0.33333147
  %v370 = vmul.f32 %v369, %v355
  %v371 = vmul.f32 %v370, %v354
  %v372 = vadd.f32 %v371, %v354
  %vm373 = vcmp.gt.f32.partialorder %v350, %v349
  %v374 = vsub.f32 1.5707964, %v372
  %v375 = vsel %vm373, %v374, %v372
  %vm376 = vcmp.lt.f32.partialorder %v205, 0.0
  %v377 = vsub.f32 3.1415927, %v375
  %v378 = vsel %vm376, %v377, %v375
  %vm379 = vcmp.lt.s32.totalorder %v205, 0
  %v380 = vsel %vm379, 3.1415927, 0.0
  %vm381 = vcmp.eq.f32.partialorder %v187, 0.0
  %v382 = vsel %vm381, %v380, %v378
  %vm383 = vcmp.ne.f32.partialorder %v205, %v205
  %vm384 = vcmp.ne.f32.partialorder %v187, %v187
  %vm385 = vmor %vm383, %vm384
  %v386 = vsel %vm385, nan, %v382
  %vm387 = vcmp.lt.f32.partialorder %v205, 0.0
  %v388 = vsel %vm387, 2.3561945, 0.7853982
  %vm389 = vcmp.eq.s32.totalorder %v349, inf
  %vm390 = vcmp.eq.s32.totalorder %v350, inf
  %vm391 = vmand %vm389, %vm390
  %v392 = vsel %vm391, %v388, %v386
  %v393 = vand.u32 2147483647, %v392
  %v394 = vand.u32 %v187, 2147483648
  %v395 = vor.u32 %v393, %v394
  %v396 = vand.u32 2147483647, %v206
  %v397 = vand.u32 2147483647, %v188
  %v398 = vmin.f32 %v396, %v397
  %v399 = vmax.f32 %v396, %v397
  %v400 = vrcp.pop %v399
  %v401 = vmul.f32 %v398, %v400
  %v402 = vmul.f32 %v401, %v401
  %v403 = vmul.f32 0.002785687, %v402
  %v404 = vadd.f32 %v403, -0.015866
  %v405 = vmul.f32 %v404, %v402
  %v406 = vadd.f32 %v405, 0.04247222
  %v407 = vmul.f32 %v406, %v402
  %v408 = vadd.f32 %v407, -0.074975304
  %v409 = vmul.f32 %v408, %v402
  %v410 = vadd.f32 %v409, 0.1064488
  %v411 = vmul.f32 %v410, %v402
  %v412 = vadd.f32 %v411, -0.14207031
  %v413 = vmul.f32 %v412, %v402
  %v414 = vadd.f32 %v413, 0.19993454
  %v415 = vmul.f32 %v414, %v402
  %v416 = vadd.f32 %v415, -0.33333147
  %v417 = vmul.f32 %v416, %v402
  %v418 = vmul.f32 %v417, %v401
  %v419 = vadd.f32 %v418, %v401
  %vm420 = vcmp.gt.f32.partialorder %v397, %v396
  %v421 = vsub.f32 1.5707964, %v419
  %v422 = vsel %vm420, %v421, %v419
  %vm423 = vcmp.lt.f32.partialorder %v206, 0.0
  %v424 = vsub.f32 3.1415927, %v422
  %v425 = vsel %vm423, %v424, %v422
  %vm426 = vcmp.lt.s32.totalorder %v206, 0
  %v427 = vsel %vm426, 3.1415927, 0.0
  %vm428 = vcmp.eq.f32.partialorder %v188, 0.0
  %v429 = vsel %vm428, %v427, %v425
  %vm430 = vcmp.ne.f32.partialorder %v206, %v206
  %vm431 = vcmp.ne.f32.partialorder %v188, %v188
  %vm432 = vmor %vm430, %vm431
  %v433 = vsel %vm432, nan, %v429
  %vm434 = vcmp.lt.f32.partialorder %v206, 0.0
  %v435 = vsel %vm434, 2.3561945, 0.7853982
  %vm436 = vcmp.eq.s32.totalorder %v396, inf
  %vm437 = vcmp.eq.s32.totalorder %v397, inf
  %vm438 = vmand %vm436, %vm437
  %v439 = vsel %vm438, %v435, %v433
  %v440 = vand.u32 2147483647, %v439
  %v441 = vand.u32 %v188, 2147483648
  %v442 = vor.u32 %v440, %v441
  %v443 = vand.u32 2147483647, %v207
  %v444 = vand.u32 2147483647, %v189
  %v445 = vmin.f32 %v443, %v444
  %v446 = vmax.f32 %v443, %v444
  %v447 = vrcp.pop %v446
  %v448 = vmul.f32 %v445, %v447
  %v449 = vmul.f32 %v448, %v448
  %v450 = vmul.f32 0.002785687, %v449
  %v451 = vadd.f32 %v450, -0.015866
  %v452 = vmul.f32 %v451, %v449
  %v453 = vadd.f32 %v452, 0.04247222
  %v454 = vmul.f32 %v453, %v449
  %v455 = vadd.f32 %v454, -0.074975304
  %v456 = vmul.f32 %v455, %v449
  %v457 = vadd.f32 %v456, 0.1064488
  %v458 = vmul.f32 %v457, %v449
  %v459 = vadd.f32 %v458, -0.14207031
  %v460 = vmul.f32 %v459, %v449
  %v461 = vadd.f32 %v460, 0.19993454
  %v462 = vmul.f32 %v461, %v449
  %v463 = vadd.f32 %v462, -0.33333147
  %v464 = vmul.f32 %v463, %v449
  %v465 = vmul.f32 %v464, %v448
  %v466 = vadd.f32 %v465, %v448
  %vm467 = vcmp.gt.f32.partialorder %v444, %v443
  %v468 = vsub.f32 1.5707964, %v466
  %v469 = vsel %vm467, %v468, %v466
  %vm470 = vcmp.lt.f32.partialorder %v207, 0.0
  %v471 = vsub.f32 3.1415927, %v469
  %v472 = vsel %vm470, %v471, %v469
  %vm473 = vcmp.lt.s32.totalorder %v207, 0
  %v474 = vsel %vm473, 3.1415927, 0.0
  %vm475 = vcmp.eq.f32.partialorder %v189, 0.0
  %v476 = vsel %vm475, %v474, %v472
  %vm477 = vcmp.ne.f32.partialorder %v207, %v207
  %vm478 = vcmp.ne.f32.partialorder %v189, %v189
  %vm479 = vmor %vm477, %vm478
  %v480 = vsel %vm479, nan, %v476
  %vm481 = vcmp.lt.f32.partialorder %v207, 0.0
  %v482 = vsel %vm481, 2.3561945, 0.7853982
  %vm483 = vcmp.eq.s32.totalorder %v443, inf
  %vm484 = vcmp.eq.s32.totalorder %v444, inf
  %vm485 = vmand %vm483, %vm484
  %v486 = vsel %vm485, %v482, %v480
  %v487 = vand.u32 2147483647, %v486
  %v488 = vand.u32 %v189, 2147483648
  %v489 = vor.u32 %v487, %v488
  %v490 = vmul.f32 %v97, %v111
  %v491 = vmul.f32 %v98, %v112
  %v492 = vmul.f32 %v99, %v113
  %v493 = vmul.f32 %v100, %v114
  %v494 = vmul.f32 %v101, %v115
  %v495 = vmul.f32 %v102, %v116
  %v496 = vmul.f32 %v118, %v104
  %v497 = vmul.f32 %v119, %v105
  %v498 = vmul.f32 %v120, %v106
  %v499 = vmul.f32 %v121, %v107
  %v500 = vmul.f32 %v122, %v108
  %v501 = vmul.f32 %v123, %v109
  %v502 = vsub.f32 %v490, %v496
  %v503 = vsub.f32 %v491, %v497
  %v504 = vsub.f32 %v492, %v498
  %v505 = vsub.f32 %v493, %v499
  %v506 = vsub.f32 %v494, %v500
  %v507 = vsub.f32 %v495, %v501
  %v508 = vmul.f32 %v502, 2.0
  %v509 = vmul.f32 %v503, 2.0
  %v510 = vmul.f32 %v504, 2.0
  %v511 = vmul.f32 %v505, 2.0
  %v512 = vmul.f32 %v506, 2.0
  %v513 = vmul.f32 %v507, 2.0
  %v514 = vmul.f32 %v160, %v160
  %v515 = vmul.f32 %v161, %v161
  %v516 = vmul.f32 %v162, %v162
  %v517 = vmul.f32 %v163, %v163
  %v518 = vmul.f32 %v164, %v164
  %v519 = vmul.f32 %v165, %v165
  %v520 = vmul.f32 %v508, %v508
  %v521 = vmul.f32 %v509, %v509
  %v522 = vmul.f32 %v510, %v510
  %v523 = vmul.f32 %v511, %v511
  %v524 = vmul.f32 %v512, %v512
  %v525 = vmul.f32 %v513, %v513
  %v526 = vsub.f32 %v514, %v520
  %v527 = vsub.f32 %v515, %v521
  %v528 = vsub.f32 %v516, %v522
  %v529 = vsub.f32 %v517, %v523
  %v530 = vsub.f32 %v518, %v524
  %v531 = vsub.f32 %v519, %v525
  %v532 = vmax.f32 %v526, 0.0
  %v533 = vmax.f32 %v527, 0.0
  %v534 = vmax.f32 %v528, 0.0
  %v535 = vmax.f32 %v529, 0.0
  %v536 = vmax.f32 %v530, 0.0
  %v537 = vmax.f32 %v531, 0.0
  %v538 = vrsqrt.pop %v532
  %v539 = vmul.f32 %v532, %v538
  %vm540 = vcmp.eq.f32.partialorder %v532, inf
  %v541 = vsel %vm540, %v532, %v539
  %vm542 = vcmp.eq.f32.partialorder %v532, 0.0
  %v543 = vand.u32 %v532, 2147483648
  %v544 = vsel %vm542, %v543, %v541
  %v545 = vrsqrt.pop %v533
  %v546 = vmul.f32 %v533, %v545
  %vm547 = vcmp.eq.f32.partialorder %v533, inf
  %v548 = vsel %vm547, %v533, %v546
  %vm549 = vcmp.eq.f32.partialorder %v533, 0.0
  %v550 = vand.u32 %v533, 2147483648
  %v551 = vsel %vm549, %v550, %v548
  %v552 = vrsqrt.pop %v534
  %v553 = vmul.f32 %v534, %v552
  %vm554 = vcmp.eq.f32.partialorder %v534, inf
  %v555 = vsel %vm554, %v534, %v553
  %vm556 = vcmp.eq.f32.partialorder %v534, 0.0
  %v557 = vand.u32 %v534, 2147483648
  %v558 = vsel %vm556, %v557, %v555
  %v559 = vrsqrt.pop %v535
  %v560 = vmul.f32 %v535, %v559
  %vm561 = vcmp.eq.f32.partialorder %v535, inf
  %v562 = vsel %vm561, %v535, %v560
  %vm563 = vcmp.eq.f32.partialorder %v535, 0.0
  %v564 = vand.u32 %v535, 2147483648
  %v565 = vsel %vm563, %v564, %v562
  %v566 = vrsqrt.pop %v536
  %v567 = vmul.f32 %v536, %v566
  %vm568 = vcmp.eq.f32.partialorder %v536, inf
  %v569 = vsel %vm568, %v536, %v567
  %vm570 = vcmp.eq.f32.partialorder %v536, 0.0
  %v571 = vand.u32 %v536, 2147483648
  %v572 = vsel %vm570, %v571, %v569
  %v573 = vrsqrt.pop %v537
  %v574 = vmul.f32 %v537, %v573
  %vm575 = vcmp.eq.f32.partialorder %v537, inf
  %v576 = vsel %vm575, %v537, %v574
  %vm577 = vcmp.eq.f32.partialorder %v537, 0.0
  %v578 = vand.u32 %v537, 2147483648
  %v579 = vsel %vm577, %v578, %v576
  %v580 = vand.u32 2147483647, %v544
  %v581 = vand.u32 2147483647, %v508
  %v582 = vmin.f32 %v580, %v581
  %v583 = vmax.f32 %v580, %v581
  %v584 = vrcp.pop %v583
  %v585 = vmul.f32 %v582, %v584
  %v586 = vmul.f32 %v585, %v585
  %v587 = vmul.f32 0.002785687, %v586
  %v588 = vadd.f32 %v587, -0.015866
  %v589 = vmul.f32 %v588, %v586
  %v590 = vadd.f32 %v589, 0.04247222
  %v591 = vmul.f32 %v590, %v586
  %v592 = vadd.f32 %v591, -0.074975304
  %v593 = vmul.f32 %v592, %v586
  %v594 = vadd.f32 %v593, 0.1064488
  %v595 = vmul.f32 %v594, %v586
  %v596 = vadd.f32 %v595, -0.14207031
  %v597 = vmul.f32 %v596, %v586
  %v598 = vadd.f32 %v597, 0.19993454
  %v599 = vmul.f32 %v598, %v586
  %v600 = vadd.f32 %v599, -0.33333147
  %v601 = vmul.f32 %v600, %v586
  %v602 = vmul.f32 %v601, %v585
  %v603 = vadd.f32 %v602, %v585
  %vm604 = vcmp.gt.f32.partialorder %v581, %v580
  %v605 = vsub.f32 1.5707964, %v603
  %v606 = vsel %vm604, %v605, %v603
  %vm607 = vcmp.lt.f32.partialorder %v544, 0.0
  %v608 = vsub.f32 3.1415927, %v606
  %v609 = vsel %vm607, %v608, %v606
  %vm610 = vcmp.lt.s32.totalorder %v544, 0
  %v611 = vsel %vm610, 3.1415927, 0.0
  %vm612 = vcmp.eq.f32.partialorder %v508, 0.0
  %v613 = vsel %vm612, %v611, %v609
  %vm614 = vcmp.ne.f32.partialorder %v544, %v544
  %vm615 = vcmp.ne.f32.partialorder %v508, %v508
  %vm616 = vmor %vm614, %vm615
  %v617 = vsel %vm616, nan, %v613
  %vm618 = vcmp.lt.f32.partialorder %v544, 0.0
  %v619 = vsel %vm618, 2.3561945, 0.7853982
  %vm620 = vcmp.eq.s32.totalorder %v580, inf
  %vm621 = vcmp.eq.s32.totalorder %v581, inf
  %vm622 = vmand %vm620, %vm621
  %v623 = vsel %vm622, %v619, %v617
  %v624 = vand.u32 2147483647, %v623
  %v625 = vand.u32 %v508, 2147483648
  %v626 = vor.u32 %v624, %v625
  %v627 = vand.u32 2147483647, %v551
  %v628 = vand.u32 2147483647, %v509
  %v629 = vmin.f32 %v627, %v628
  %v630 = vmax.f32 %v627, %v628
  %v631 = vrcp.pop %v630
  %v632 = vmul.f32 %v629, %v631
  %v633 = vmul.f32 %v632, %v632
  %v634 = vmul.f32 0.002785687, %v633
  %v635 = vadd.f32 %v634, -0.015866
  %v636 = vmul.f32 %v635, %v633
  %v637 = vadd.f32 %v636, 0.04247222
  %v638 = vmul.f32 %v637, %v633
  %v639 = vadd.f32 %v638, -0.074975304
  %v640 = vmul.f32 %v639, %v633
  %v641 = vadd.f32 %v640, 0.1064488
  %v642 = vmul.f32 %v641, %v633
  %v643 = vadd.f32 %v642, -0.14207031
  %v644 = vmul.f32 %v643, %v633
  %v645 = vadd.f32 %v644, 0.19993454
  %v646 = vmul.f32 %v645, %v633
  %v647 = vadd.f32 %v646, -0.33333147
  %v648 = vmul.f32 %v647, %v633
  %v649 = vmul.f32 %v648, %v632
  %v650 = vadd.f32 %v649, %v632
  %vm651 = vcmp.gt.f32.partialorder %v628, %v627
  %v652 = vsub.f32 1.5707964, %v650
  %v653 = vsel %vm651, %v652, %v650
  %vm654 = vcmp.lt.f32.partialorder %v551, 0.0
  %v655 = vsub.f32 3.1415927, %v653
  %v656 = vsel %vm654, %v655, %v653
  %vm657 = vcmp.lt.s32.totalorder %v551, 0
  %v658 = vsel %vm657, 3.1415927, 0.0
  %vm659 = vcmp.eq.f32.partialorder %v509, 0.0
  %v660 = vsel %vm659, %v658, %v656
  %vm661 = vcmp.ne.f32.partialorder %v551, %v551
  %vm662 = vcmp.ne.f32.partialorder %v509, %v509
  %vm663 = vmor %vm661, %vm662
  %v664 = vsel %vm663, nan, %v660
  %vm665 = vcmp.lt.f32.partialorder %v551, 0.0
  %v666 = vsel %vm665, 2.3561945, 0.7853982
  %vm667 = vcmp.eq.s32.totalorder %v627, inf
  %vm668 = vcmp.eq.s32.totalorder %v628, inf
  %vm669 = vmand %vm667, %vm668
  %v670 = vsel %vm669, %v666, %v664
  %v671 = vand.u32 2147483647, %v670
  %v672 = vand.u32 %v509, 2147483648
  %v673 = vor.u32 %v671, %v672
  %v674 = vand.u32 2147483647, %v558
  %v675 = vand.u32 2147483647, %v510
  %v676 = vmin.f32 %v674, %v675
  %v677 = vmax.f32 %v674, %v675
  %v678 = vrcp.pop %v677
  %v679 = vmul.f32 %v676, %v678
  %v680 = vmul.f32 %v679, %v679
  %v681 = vmul.f32 0.002785687, %v680
  %v682 = vadd.f32 %v681, -0.015866
  %v683 = vmul.f32 %v682, %v680
  %v684 = vadd.f32 %v683, 0.04247222
  %v685 = vmul.f32 %v684, %v680
  %v686 = vadd.f32 %v685, -0.074975304
  %v687 = vmul.f32 %v686, %v680
  %v688 = vadd.f32 %v687, 0.1064488
  %v689 = vmul.f32 %v688, %v680
  %v690 = vadd.f32 %v689, -0.14207031
  %v691 = vmul.f32 %v690, %v680
  %v692 = vadd.f32 %v691, 0.19993454
  %v693 = vmul.f32 %v692, %v680
  %v694 = vadd.f32 %v693, -0.33333147
  %v695 = vmul.f32 %v694, %v680
  %v696 = vmul.f32 %v695, %v679
  %v697 = vadd.f32 %v696, %v679
  %vm698 = vcmp.gt.f32.partialorder %v675, %v674
  %v699 = vsub.f32 1.5707964, %v697
  %v700 = vsel %vm698, %v699, %v697
  %vm701 = vcmp.lt.f32.partialorder %v558, 0.0
  %v702 = vsub.f32 3.1415927, %v700
  %v703 = vsel %vm701, %v702, %v700
  %vm704 = vcmp.lt.s32.totalorder %v558, 0
  %v705 = vsel %vm704, 3.1415927, 0.0
  %vm706 = vcmp.eq.f32.partialorder %v510, 0.0
  %v707 = vsel %vm706, %v705, %v703
  %vm708 = vcmp.ne.f32.partialorder %v558, %v558
  %vm709 = vcmp.ne.f32.partialorder %v510, %v510
  %vm710 = vmor %vm708, %vm709
  %v711 = vsel %vm710, nan, %v707
  %vm712 = vcmp.lt.f32.partialorder %v558, 0.0
  %v713 = vsel %vm712, 2.3561945, 0.7853982
  %vm714 = vcmp.eq.s32.totalorder %v674, inf
  %vm715 = vcmp.eq.s32.totalorder %v675, inf
  %vm716 = vmand %vm714, %vm715
  %v717 = vsel %vm716, %v713, %v711
  %v718 = vand.u32 2147483647, %v717
  %v719 = vand.u32 %v510, 2147483648
  %v720 = vor.u32 %v718, %v719
  %v721 = vand.u32 2147483647, %v565
  %v722 = vand.u32 2147483647, %v511
  %v723 = vmin.f32 %v721, %v722
  %v724 = vmax.f32 %v721, %v722
  %v725 = vrcp.pop %v724
  %v726 = vmul.f32 %v723, %v725
  %v727 = vmul.f32 %v726, %v726
  %v728 = vmul.f32 0.002785687, %v727
  %v729 = vadd.f32 %v728, -0.015866
  %v730 = vmul.f32 %v729, %v727
  %v731 = vadd.f32 %v730, 0.04247222
  %v732 = vmul.f32 %v731, %v727
  %v733 = vadd.f32 %v732, -0.074975304
  %v734 = vmul.f32 %v733, %v727
  %v735 = vadd.f32 %v734, 0.1064488
  %v736 = vmul.f32 %v735, %v727
  %v737 = vadd.f32 %v736, -0.14207031
  %v738 = vmul.f32 %v737, %v727
  %v739 = vadd.f32 %v738, 0.19993454
  %v740 = vmul.f32 %v739, %v727
  %v741 = vadd.f32 %v740, -0.33333147
  %v742 = vmul.f32 %v741, %v727
  %v743 = vmul.f32 %v742, %v726
  %v744 = vadd.f32 %v743, %v726
  %vm745 = vcmp.gt.f32.partialorder %v722, %v721
  %v746 = vsub.f32 1.5707964, %v744
  %v747 = vsel %vm745, %v746, %v744
  %vm748 = vcmp.lt.f32.partialorder %v565, 0.0
  %v749 = vsub.f32 3.1415927, %v747
  %v750 = vsel %vm748, %v749, %v747
  %vm751 = vcmp.lt.s32.totalorder %v565, 0
  %v752 = vsel %vm751, 3.1415927, 0.0
  %vm753 = vcmp.eq.f32.partialorder %v511, 0.0
  %v754 = vsel %vm753, %v752, %v750
  %vm755 = vcmp.ne.f32.partialorder %v565, %v565
  %vm756 = vcmp.ne.f32.partialorder %v511, %v511
  %vm757 = vmor %vm755, %vm756
  %v758 = vsel %vm757, nan, %v754
  %vm759 = vcmp.lt.f32.partialorder %v565, 0.0
  %v760 = vsel %vm759, 2.3561945, 0.7853982
  %vm761 = vcmp.eq.s32.totalorder %v721, inf
  %vm762 = vcmp.eq.s32.totalorder %v722, inf
  %vm763 = vmand %vm761, %vm762
  %v764 = vsel %vm763, %v760, %v758
  %v765 = vand.u32 2147483647, %v764
  %v766 = vand.u32 %v511, 2147483648
  %v767 = vor.u32 %v765, %v766
  %v768 = vand.u32 2147483647, %v572
  %v769 = vand.u32 2147483647, %v512
  %v770 = vmin.f32 %v768, %v769
  %v771 = vmax.f32 %v768, %v769
  %v772 = vrcp.pop %v771
  %v773 = vmul.f32 %v770, %v772
  %v774 = vmul.f32 %v773, %v773
  %v775 = vmul.f32 0.002785687, %v774
  %v776 = vadd.f32 %v775, -0.015866
  %v777 = vmul.f32 %v776, %v774
  %v778 = vadd.f32 %v777, 0.04247222
  %v779 = vmul.f32 %v778, %v774
  %v780 = vadd.f32 %v779, -0.074975304
  %v781 = vmul.f32 %v780, %v774
  %v782 = vadd.f32 %v781, 0.1064488
  %v783 = vmul.f32 %v782, %v774
  %v784 = vadd.f32 %v783, -0.14207031
  %v785 = vmul.f32 %v784, %v774
  %v786 = vadd.f32 %v785, 0.19993454
  %v787 = vmul.f32 %v786, %v774
  %v788 = vadd.f32 %v787, -0.33333147
  %v789 = vmul.f32 %v788, %v774
  %v790 = vmul.f32 %v789, %v773
  %v791 = vadd.f32 %v790, %v773
  %vm792 = vcmp.gt.f32.partialorder %v769, %v768
  %v793 = vsub.f32 1.5707964, %v791
  %v794 = vsel %vm792, %v793, %v791
  %vm795 = vcmp.lt.f32.partialorder %v572, 0.0
  %v796 = vsub.f32 3.1415927, %v794
  %v797 = vsel %vm795, %v796, %v794
  %vm798 = vcmp.lt.s32.totalorder %v572, 0
  %v799 = vsel %vm798, 3.1415927, 0.0
  %vm800 = vcmp.eq.f32.partialorder %v512, 0.0
  %v801 = vsel %vm800, %v799, %v797
  %vm802 = vcmp.ne.f32.partialorder %v572, %v572
  %vm803 = vcmp.ne.f32.partialorder %v512, %v512
  %vm804 = vmor %vm802, %vm803
  %v805 = vsel %vm804, nan, %v801
  %vm806 = vcmp.lt.f32.partialorder %v572, 0.0
  %v807 = vsel %vm806, 2.3561945, 0.7853982
  %vm808 = vcmp.eq.s32.totalorder %v768, inf
  %vm809 = vcmp.eq.s32.totalorder %v769, inf
  %vm810 = vmand %vm808, %vm809
  %v811 = vsel %vm810, %v807, %v805
  %v812 = vand.u32 2147483647, %v811
  %v813 = vand.u32 %v512, 2147483648
  %v814 = vor.u32 %v812, %v813
  %v815 = vand.u32 2147483647, %v579
  %v816 = vand.u32 2147483647, %v513
  %v817 = vmin.f32 %v815, %v816
  %v818 = vmax.f32 %v815, %v816
  %v819 = vrcp.pop %v818
  %v820 = vmul.f32 %v817, %v819
  %v821 = vmul.f32 %v820, %v820
  %v822 = vmul.f32 0.002785687, %v821
  %v823 = vadd.f32 %v822, -0.015866
  %v824 = vmul.f32 %v823, %v821
  %v825 = vadd.f32 %v824, 0.04247222
  %v826 = vmul.f32 %v825, %v821
  %v827 = vadd.f32 %v826, -0.074975304
  %v828 = vmul.f32 %v827, %v821
  %v829 = vadd.f32 %v828, 0.1064488
  %v830 = vmul.f32 %v829, %v821
  %v831 = vadd.f32 %v830, -0.14207031
  %v832 = vmul.f32 %v831, %v821
  %v833 = vadd.f32 %v832, 0.19993454
  %v834 = vmul.f32 %v833, %v821
  %v835 = vadd.f32 %v834, -0.33333147
  %v836 = vmul.f32 %v835, %v821
  %v837 = vmul.f32 %v836, %v820
  %v838 = vadd.f32 %v837, %v820
  %vm839 = vcmp.gt.f32.partialorder %v816, %v815
  %v840 = vsub.f32 1.5707964, %v838
  %v841 = vsel %vm839, %v840, %v838
  %vm842 = vcmp.lt.f32.partialorder %v579, 0.0
  %v843 = vsub.f32 3.1415927, %v841
  %v844 = vsel %vm842, %v843, %v841
  %vm845 = vcmp.lt.s32.totalorder %v579, 0
  %v846 = vsel %vm845, 3.1415927, 0.0
  %vm847 = vcmp.eq.f32.partialorder %v513, 0.0
  %v848 = vsel %vm847, %v846, %v844
  %vm849 = vcmp.ne.f32.partialorder %v579, %v579
  %vm850 = vcmp.ne.f32.partialorder %v513, %v513
  %vm851 = vmor %vm849, %vm850
  %v852 = vsel %vm851, nan, %v848
  %vm853 = vcmp.lt.f32.partialorder %v579, 0.0
  %v854 = vsel %vm853, 2.3561945, 0.7853982
  %vm855 = vcmp.eq.s32.totalorder %v815, inf
  %vm856 = vcmp.eq.s32.totalorder %v816, inf
  %vm857 = vmand %vm855, %vm856
  %v858 = vsel %vm857, %v854, %v852
  %v859 = vand.u32 2147483647, %v858
  %v860 = vand.u32 %v513, 2147483648
  %v861 = vor.u32 %v859, %v860
  %v862 = vmul.f32 %v97, %v118
  %v863 = vmul.f32 %v98, %v119
  %v864 = vmul.f32 %v99, %v120
  %v865 = vmul.f32 %v100, %v121
  %v866 = vmul.f32 %v101, %v122
  %v867 = vmul.f32 %v102, %v123
  %v868 = vmul.f32 %v104, %v111
  %v869 = vmul.f32 %v105, %v112
  %v870 = vmul.f32 %v106, %v113
  %v871 = vmul.f32 %v107, %v114
  %v872 = vmul.f32 %v108, %v115
  %v873 = vmul.f32 %v109, %v116
  %v874 = vadd.f32 %v862, %v868
  %v875 = vadd.f32 %v863, %v869
  %v876 = vadd.f32 %v864, %v870
  %v877 = vadd.f32 %v865, %v871
  %v878 = vadd.f32 %v866, %v872
  %v879 = vadd.f32 %v867, %v873
  %v880 = vmul.f32 %v874, 2.0
  %v881 = vmul.f32 %v875, 2.0
  %v882 = vmul.f32 %v876, 2.0
  %v883 = vmul.f32 %v877, 2.0
  %v884 = vmul.f32 %v878, 2.0
  %v885 = vmul.f32 %v879, 2.0
  %v886 = vadd.f32 %v142, %v154
  %v887 = vadd.f32 %v143, %v155
  %v888 = vadd.f32 %v144, %v156
  %v889 = vadd.f32 %v145, %v157
  %v890 = vadd.f32 %v146, %v158
  %v891 = vadd.f32 %v147, %v159
  %v892 = vmul.f32 %v886, 2.0
  %v893 = vmul.f32 %v887, 2.0
  %v894 = vmul.f32 %v888, 2.0
  %v895 = vmul.f32 %v889, 2.0
  %v896 = vmul.f32 %v890, 2.0
  %v897 = vmul.f32 %v891, 2.0
  %v898 = vsub.f32 %v160, %v892
  %v899 = vsub.f32 %v161, %v893
  %v900 = vsub.f32 %v162, %v894
  %v901 = vsub.f32 %v163, %v895
  %v902 = vsub.f32 %v164, %v896
  %v903 = vsub.f32 %v165, %v897
  %v904 = vand.u32 2147483647, %v898
  %v905 = vand.u32 2147483647, %v880
  %v906 = vmin.f32 %v904, %v905
  %v907 = vmax.f32 %v904, %v905
  %v908 = vrcp.pop %v907
  %v909 = vmul.f32 %v906, %v908
  %v910 = vmul.f32 %v909, %v909
  %v911 = vmul.f32 0.002785687, %v910
  %v912 = vadd.f32 %v911, -0.015866
  %v913 = vmul.f32 %v912, %v910
  %v914 = vadd.f32 %v913, 0.04247222
  %v915 = vmul.f32 %v914, %v910
  %v916 = vadd.f32 %v915, -0.074975304
  %v917 = vmul.f32 %v916, %v910
  %v918 = vadd.f32 %v917, 0.1064488
  %v919 = vmul.f32 %v918, %v910
  %v920 = vadd.f32 %v919, -0.14207031
  %v921 = vmul.f32 %v920, %v910
  %v922 = vadd.f32 %v921, 0.19993454
  %v923 = vmul.f32 %v922, %v910
  %v924 = vadd.f32 %v923, -0.33333147
  %v925 = vmul.f32 %v924, %v910
  %v926 = vmul.f32 %v925, %v909
  %v927 = vadd.f32 %v926, %v909
  %vm928 = vcmp.gt.f32.partialorder %v905, %v904
  %v929 = vsub.f32 1.5707964, %v927
  %v930 = vsel %vm928, %v929, %v927
  %vm931 = vcmp.lt.f32.partialorder %v898, 0.0
  %v932 = vsub.f32 3.1415927, %v930
  %v933 = vsel %vm931, %v932, %v930
  %vm934 = vcmp.lt.s32.totalorder %v898, 0
  %v935 = vsel %vm934, 3.1415927, 0.0
  %vm936 = vcmp.eq.f32.partialorder %v880, 0.0
  %v937 = vsel %vm936, %v935, %v933
  %vm938 = vcmp.ne.f32.partialorder %v898, %v898
  %vm939 = vcmp.ne.f32.partialorder %v880, %v880
  %vm940 = vmor %vm938, %vm939
  %v941 = vsel %vm940, nan, %v937
  %vm942 = vcmp.lt.f32.partialorder %v898, 0.0
  %v943 = vsel %vm942, 2.3561945, 0.7853982
  %vm944 = vcmp.eq.s32.totalorder %v904, inf
  %vm945 = vcmp.eq.s32.totalorder %v905, inf
  %vm946 = vmand %vm944, %vm945
  %v947 = vsel %vm946, %v943, %v941
  %v948 = vand.u32 2147483647, %v947
  %v949 = vand.u32 %v880, 2147483648
  %v950 = vor.u32 %v948, %v949
  %v951 = vand.u32 2147483647, %v899
  %v952 = vand.u32 2147483647, %v881
  %v953 = vmin.f32 %v951, %v952
  %v954 = vmax.f32 %v951, %v952
  %v955 = vrcp.pop %v954
  %v956 = vmul.f32 %v953, %v955
  %v957 = vmul.f32 %v956, %v956
  %v958 = vmul.f32 0.002785687, %v957
  %v959 = vadd.f32 %v958, -0.015866
  %v960 = vmul.f32 %v959, %v957
  %v961 = vadd.f32 %v960, 0.04247222
  %v962 = vmul.f32 %v961, %v957
  %v963 = vadd.f32 %v962, -0.074975304
  %v964 = vmul.f32 %v963, %v957
  %v965 = vadd.f32 %v964, 0.1064488
  %v966 = vmul.f32 %v965, %v957
  %v967 = vadd.f32 %v966, -0.14207031
  %v968 = vmul.f32 %v967, %v957
  %v969 = vadd.f32 %v968, 0.19993454
  %v970 = vmul.f32 %v969, %v957
  %v971 = vadd.f32 %v970, -0.33333147
  %v972 = vmul.f32 %v971, %v957
  %v973 = vmul.f32 %v972, %v956
  %v974 = vadd.f32 %v973, %v956
  %vm975 = vcmp.gt.f32.partialorder %v952, %v951
  %v976 = vsub.f32 1.5707964, %v974
  %v977 = vsel %vm975, %v976, %v974
  %vm978 = vcmp.lt.f32.partialorder %v899, 0.0
  %v979 = vsub.f32 3.1415927, %v977
  %v980 = vsel %vm978, %v979, %v977
  %vm981 = vcmp.lt.s32.totalorder %v899, 0
  %v982 = vsel %vm981, 3.1415927, 0.0
  %vm983 = vcmp.eq.f32.partialorder %v881, 0.0
  %v984 = vsel %vm983, %v982, %v980
  %vm985 = vcmp.ne.f32.partialorder %v899, %v899
  %vm986 = vcmp.ne.f32.partialorder %v881, %v881
  %vm987 = vmor %vm985, %vm986
  %v988 = vsel %vm987, nan, %v984
  %vm989 = vcmp.lt.f32.partialorder %v899, 0.0
  %v990 = vsel %vm989, 2.3561945, 0.7853982
  %vm991 = vcmp.eq.s32.totalorder %v951, inf
  %vm992 = vcmp.eq.s32.totalorder %v952, inf
  %vm993 = vmand %vm991, %vm992
  %v994 = vsel %vm993, %v990, %v988
  %v995 = vand.u32 2147483647, %v994
  %v996 = vand.u32 %v881, 2147483648
  %v997 = vor.u32 %v995, %v996
  %v998 = vand.u32 2147483647, %v900
  %v999 = vand.u32 2147483647, %v882
  %v1000 = vmin.f32 %v998, %v999
  %v1001 = vmax.f32 %v998, %v999
  %v1002 = vrcp.pop %v1001
  %v1003 = vmul.f32 %v1000, %v1002
  %v1004 = vmul.f32 %v1003, %v1003
  %v1005 = vmul.f32 0.002785687, %v1004
  %v1006 = vadd.f32 %v1005, -0.015866
  %v1007 = vmul.f32 %v1006, %v1004
  %v1008 = vadd.f32 %v1007, 0.04247222
  %v1009 = vmul.f32 %v1008, %v1004
  %v1010 = vadd.f32 %v1009, -0.074975304
  %v1011 = vmul.f32 %v1010, %v1004
  %v1012 = vadd.f32 %v1011, 0.1064488
  %v1013 = vmul.f32 %v1012, %v1004
  %v1014 = vadd.f32 %v1013, -0.14207031
  %v1015 = vmul.f32 %v1014, %v1004
  %v1016 = vadd.f32 %v1015, 0.19993454
  %v1017 = vmul.f32 %v1016, %v1004
  %v1018 = vadd.f32 %v1017, -0.33333147
  %v1019 = vmul.f32 %v1018, %v1004
  %v1020 = vmul.f32 %v1019, %v1003
  %v1021 = vadd.f32 %v1020, %v1003
  %vm1022 = vcmp.gt.f32.partialorder %v999, %v998
  %v1023 = vsub.f32 1.5707964, %v1021
  %v1024 = vsel %vm1022, %v1023, %v1021
  %vm1025 = vcmp.lt.f32.partialorder %v900, 0.0
  %v1026 = vsub.f32 3.1415927, %v1024
  %v1027 = vsel %vm1025, %v1026, %v1024
  %vm1028 = vcmp.lt.s32.totalorder %v900, 0
  %v1029 = vsel %vm1028, 3.1415927, 0.0
  %vm1030 = vcmp.eq.f32.partialorder %v882, 0.0
  %v1031 = vsel %vm1030, %v1029, %v1027
  %vm1032 = vcmp.ne.f32.partialorder %v900, %v900
  %vm1033 = vcmp.ne.f32.partialorder %v882, %v882
  %vm1034 = vmor %vm1032, %vm1033
  %v1035 = vsel %vm1034, nan, %v1031
  %vm1036 = vcmp.lt.f32.partialorder %v900, 0.0
  %v1037 = vsel %vm1036, 2.3561945, 0.7853982
  %vm1038 = vcmp.eq.s32.totalorder %v998, inf
  %vm1039 = vcmp.eq.s32.totalorder %v999, inf
  %vm1040 = vmand %vm1038, %vm1039
  %v1041 = vsel %vm1040, %v1037, %v1035
  %v1042 = vand.u32 2147483647, %v1041
  %v1043 = vand.u32 %v882, 2147483648
  %v1044 = vor.u32 %v1042, %v1043
  %v1045 = vand.u32 2147483647, %v901
  %v1046 = vand.u32 2147483647, %v883
  %v1047 = vmin.f32 %v1045, %v1046
  %v1048 = vmax.f32 %v1045, %v1046
  %v1049 = vrcp.pop %v1048
  %v1050 = vmul.f32 %v1047, %v1049
  %v1051 = vmul.f32 %v1050, %v1050
  %v1052 = vmul.f32 0.002785687, %v1051
  %v1053 = vadd.f32 %v1052, -0.015866
  %v1054 = vmul.f32 %v1053, %v1051
  %v1055 = vadd.f32 %v1054, 0.04247222
  %v1056 = vmul.f32 %v1055, %v1051
  %v1057 = vadd.f32 %v1056, -0.074975304
  %v1058 = vmul.f32 %v1057, %v1051
  %v1059 = vadd.f32 %v1058, 0.1064488
  %v1060 = vmul.f32 %v1059, %v1051
  %v1061 = vadd.f32 %v1060, -0.14207031
  %v1062 = vmul.f32 %v1061, %v1051
  %v1063 = vadd.f32 %v1062, 0.19993454
  %v1064 = vmul.f32 %v1063, %v1051
  %v1065 = vadd.f32 %v1064, -0.33333147
  %v1066 = vmul.f32 %v1065, %v1051
  %v1067 = vmul.f32 %v1066, %v1050
  %v1068 = vadd.f32 %v1067, %v1050
  %vm1069 = vcmp.gt.f32.partialorder %v1046, %v1045
  %v1070 = vsub.f32 1.5707964, %v1068
  %v1071 = vsel %vm1069, %v1070, %v1068
  %vm1072 = vcmp.lt.f32.partialorder %v901, 0.0
  %v1073 = vsub.f32 3.1415927, %v1071
  %v1074 = vsel %vm1072, %v1073, %v1071
  %vm1075 = vcmp.lt.s32.totalorder %v901, 0
  %v1076 = vsel %vm1075, 3.1415927, 0.0
  %vm1077 = vcmp.eq.f32.partialorder %v883, 0.0
  %v1078 = vsel %vm1077, %v1076, %v1074
  %vm1079 = vcmp.ne.f32.partialorder %v901, %v901
  %vm1080 = vcmp.ne.f32.partialorder %v883, %v883
  %vm1081 = vmor %vm1079, %vm1080
  %v1082 = vsel %vm1081, nan, %v1078
  %vm1083 = vcmp.lt.f32.partialorder %v901, 0.0
  %v1084 = vsel %vm1083, 2.3561945, 0.7853982
  %vm1085 = vcmp.eq.s32.totalorder %v1045, inf
  %vm1086 = vcmp.eq.s32.totalorder %v1046, inf
  %vm1087 = vmand %vm1085, %vm1086
  %v1088 = vsel %vm1087, %v1084, %v1082
  %v1089 = vand.u32 2147483647, %v1088
  %v1090 = vand.u32 %v883, 2147483648
  %v1091 = vor.u32 %v1089, %v1090
  %v1092 = vand.u32 2147483647, %v902
  %v1093 = vand.u32 2147483647, %v884
  %v1094 = vmin.f32 %v1092, %v1093
  %v1095 = vmax.f32 %v1092, %v1093
  %v1096 = vrcp.pop %v1095
  %v1097 = vmul.f32 %v1094, %v1096
  %v1098 = vmul.f32 %v1097, %v1097
  %v1099 = vmul.f32 0.002785687, %v1098
  %v1100 = vadd.f32 %v1099, -0.015866
  %v1101 = vmul.f32 %v1100, %v1098
  %v1102 = vadd.f32 %v1101, 0.04247222
  %v1103 = vmul.f32 %v1102, %v1098
  %v1104 = vadd.f32 %v1103, -0.074975304
  %v1105 = vmul.f32 %v1104, %v1098
  %v1106 = vadd.f32 %v1105, 0.1064488
  %v1107 = vmul.f32 %v1106, %v1098
  %v1108 = vadd.f32 %v1107, -0.14207031
  %v1109 = vmul.f32 %v1108, %v1098
  %v1110 = vadd.f32 %v1109, 0.19993454
  %v1111 = vmul.f32 %v1110, %v1098
  %v1112 = vadd.f32 %v1111, -0.33333147
  %v1113 = vmul.f32 %v1112, %v1098
  %v1114 = vmul.f32 %v1113, %v1097
  %v1115 = vadd.f32 %v1114, %v1097
  %vm1116 = vcmp.gt.f32.partialorder %v1093, %v1092
  %v1117 = vsub.f32 1.5707964, %v1115
  %v1118 = vsel %vm1116, %v1117, %v1115
  %vm1119 = vcmp.lt.f32.partialorder %v902, 0.0
  %v1120 = vsub.f32 3.1415927, %v1118
  %v1121 = vsel %vm1119, %v1120, %v1118
  %vm1122 = vcmp.lt.s32.totalorder %v902, 0
  %v1123 = vsel %vm1122, 3.1415927, 0.0
  %vm1124 = vcmp.eq.f32.partialorder %v884, 0.0
  %v1125 = vsel %vm1124, %v1123, %v1121
  %vm1126 = vcmp.ne.f32.partialorder %v902, %v902
  %vm1127 = vcmp.ne.f32.partialorder %v884, %v884
  %vm1128 = vmor %vm1126, %vm1127
  %v1129 = vsel %vm1128, nan, %v1125
  %vm1130 = vcmp.lt.f32.partialorder %v902, 0.0
  %v1131 = vsel %vm1130, 2.3561945, 0.7853982
  %vm1132 = vcmp.eq.s32.totalorder %v1092, inf
  %vm1133 = vcmp.eq.s32.totalorder %v1093, inf
  %vm1134 = vmand %vm1132, %vm1133
  %v1135 = vsel %vm1134, %v1131, %v1129
  %v1136 = vand.u32 2147483647, %v1135
  %v1137 = vand.u32 %v884, 2147483648
  %v1138 = vor.u32 %v1136, %v1137
  %v1139 = vand.u32 2147483647, %v903
  %v1140 = vand.u32 2147483647, %v885
  %v1141 = vmin.f32 %v1139, %v1140
  %v1142 = vmax.f32 %v1139, %v1140
  %v1143 = vrcp.pop %v1142
  %v1144 = vmul.f32 %v1141, %v1143
  %v1145 = vmul.f32 %v1144, %v1144
  %v1146 = vmul.f32 0.002785687, %v1145
  %v1147 = vadd.f32 %v1146, -0.015866
  %v1148 = vmul.f32 %v1147, %v1145
  %v1149 = vadd.f32 %v1148, 0.04247222
  %v1150 = vmul.f32 %v1149, %v1145
  %v1151 = vadd.f32 %v1150, -0.074975304
  %v1152 = vmul.f32 %v1151, %v1145
  %v1153 = vadd.f32 %v1152, 0.1064488
  %v1154 = vmul.f32 %v1153, %v1145
  %v1155 = vadd.f32 %v1154, -0.14207031
  %v1156 = vmul.f32 %v1155, %v1145
  %v1157 = vadd.f32 %v1156, 0.19993454
  %v1158 = vmul.f32 %v1157, %v1145
  %v1159 = vadd.f32 %v1158, -0.33333147
  %v1160 = vmul.f32 %v1159, %v1145
  %v1161 = vmul.f32 %v1160, %v1144
  %v1162 = vadd.f32 %v1161, %v1144
  %vm1163 = vcmp.gt.f32.partialorder %v1140, %v1139
  %v1164 = vsub.f32 1.5707964, %v1162
  %v1165 = vsel %vm1163, %v1164, %v1162
  %vm1166 = vcmp.lt.f32.partialorder %v903, 0.0
  %v1167 = vsub.f32 3.1415927, %v1165
  %v1168 = vsel %vm1166, %v1167, %v1165
  %vm1169 = vcmp.lt.s32.totalorder %v903, 0
  %v1170 = vsel %vm1169, 3.1415927, 0.0
  %vm1171 = vcmp.eq.f32.partialorder %v885, 0.0
  %v1172 = vsel %vm1171, %v1170, %v1168
  %vm1173 = vcmp.ne.f32.partialorder %v903, %v903
  %vm1174 = vcmp.ne.f32.partialorder %v885, %v885
  %vm1175 = vmor %vm1173, %vm1174
  %v1176 = vsel %vm1175, nan, %v1172
  %vm1177 = vcmp.lt.f32.partialorder %v903, 0.0
  %v1178 = vsel %vm1177, 2.3561945, 0.7853982
  %vm1179 = vcmp.eq.s32.totalorder %v1139, inf
  %vm1180 = vcmp.eq.s32.totalorder %v1140, inf
  %vm1181 = vmand %vm1179, %vm1180
  %v1182 = vsel %vm1181, %v1178, %v1176
  %v1183 = vand.u32 2147483647, %v1182
  %v1184 = vand.u32 %v885, 2147483648
  %v1185 = vor.u32 %v1183, %v1184
  %v1186 = vand.u32 2147483647, %v254
  %v1187 = vand.u32 2147483647, %v301
  %v1188 = vand.u32 2147483647, %v348
  %v1189 = vand.u32 2147483647, %v395
  %v1190 = vand.u32 2147483647, %v442
  %v1191 = vand.u32 2147483647, %v489
  %v1192 = vsub.f32 %v1186, 0.17444444
  %v1193 = vsub.f32 %v1187, 0.17444444
  %v1194 = vsub.f32 %v1188, 0.17444444
  %v1195 = vsub.f32 %v1189, 0.17444444
  %v1196 = vsub.f32 %v1190, 0.17444444
  %v1197 = vsub.f32 %v1191, 0.17444444
  %v1198 = vmax.f32 %v1192, 0.0
  %v1199 = vmax.f32 %v1193, 0.0
  %v1200 = vmax.f32 %v1194, 0.0
  %v1201 = vmax.f32 %v1195, 0.0
  %v1202 = vmax.f32 %v1196, 0.0
  %v1203 = vmax.f32 %v1197, 0.0
  %v1204 = vand.u32 2147483647, %v626
  %v1205 = vand.u32 2147483647, %v673
  %v1206 = vand.u32 2147483647, %v720
  %v1207 = vand.u32 2147483647, %v767
  %v1208 = vand.u32 2147483647, %v814
  %v1209 = vand.u32 2147483647, %v861
  %v1210 = vsub.f32 %v1204, 0.17444444
  %v1211 = vsub.f32 %v1205, 0.17444444
  %v1212 = vsub.f32 %v1206, 0.17444444
  %v1213 = vsub.f32 %v1207, 0.17444444
  %v1214 = vsub.f32 %v1208, 0.17444444
  %v1215 = vsub.f32 %v1209, 0.17444444
  %v1216 = vmax.f32 %v1210, 0.0
  %v1217 = vmax.f32 %v1211, 0.0
  %v1218 = vmax.f32 %v1212, 0.0
  %v1219 = vmax.f32 %v1213, 0.0
  %v1220 = vmax.f32 %v1214, 0.0
  %v1221 = vmax.f32 %v1215, 0.0
  %v1222 = vadd.f32 %v1198, %v1216
  %v1223 = vadd.f32 %v1199, %v1217
  %v1224 = vadd.f32 %v1200, %v1218
  %v1225 = vadd.f32 %v1201, %v1219
  %v1226 = vadd.f32 %v1202, %v1220
  %v1227 = vadd.f32 %v1203, %v1221
  %v1228 = vand.u32 2147483647, %v950
  %v1229 = vand.u32 2147483647, %v997
  %v1230 = vand.u32 2147483647, %v1044
  %v1231 = vand.u32 2147483647, %v1091
  %v1232 = vand.u32 2147483647, %v1138
  %v1233 = vand.u32 2147483647, %v1185
  %v1234 = vsub.f32 %v1228, 0.17444444
  %v1235 = vsub.f32 %v1229, 0.17444444
  %v1236 = vsub.f32 %v1230, 0.17444444
  %v1237 = vsub.f32 %v1231, 0.17444444
  %v1238 = vsub.f32 %v1232, 0.17444444
  %v1239 = vsub.f32 %v1233, 0.17444444
  %v1240 = vmax.f32 %v1234, 0.0
  %v1241 = vmax.f32 %v1235, 0.0
  %v1242 = vmax.f32 %v1236, 0.0
  %v1243 = vmax.f32 %v1237, 0.0
  %v1244 = vmax.f32 %v1238, 0.0
  %v1245 = vmax.f32 %v1239, 0.0
  %v1246 = vadd.f32 %v1222, %v1240
  %v1247 = vadd.f32 %v1223, %v1241
  %v1248 = vadd.f32 %v1224, %v1242
  %v1249 = vadd.f32 %v1225, %v1243
  %v1250 = vadd.f32 %v1226, %v1244
  %v1251 = vadd.f32 %v1227, %v1245
  %v1252 = vadd.f32 %v91, %v1246
  %v1253 = vadd.f32 %v92, %v1247
  %v1254 = vadd.f32 %v93, %v1248
  %v1255 = vadd.f32 %v94, %v1249
  %v1256 = vadd.f32 %v95, %v1250
  %v1257 = vadd.f32 %v96, %v1251
  %v1258 = vadd.f32 %v1252, %v1253
  %v1259 = vadd.f32 %v1258, %v1254
  %v1260 = vadd.f32 %v1259, %v1255
  %v1261 = vadd.f32 %v1260, %v1256
  %v1262 = vadd.f32 %v1261, %v1257
  %1263 = vst [vmem:[%s2] sm:$0xff] %v1262
  // Predicated region
  $region10: #{step_loss.1} parent=0 // pred_check
    _
  $region11: #{step_loss.1} parent=0 // pred_check_branch
    %1265 = sbr.rel (0) target = $region13
  $region12: #{step_loss.1} parent=0 // pred_region
    _
  $region13: #{step_loss.1} parent=0 // pred_fallthru
    _
  // Predicated region
  $region14: #{step_loss.1} parent=0 // pred_check
    _
  $region15: #{step_loss.1} parent=0 // pred_check_branch
    %1267 = sbr.rel (0) target = $region17
  $region16: #{step_loss.1} parent=0 // pred_region
    _
  $region17: #{step_loss.1} parent=0 // pred_fallthru
    _

</llo_original>
